<compile_context>
chip_gen: v7x
topology: tpu7x:2x2x1
jax: 0.10.0
libtpu: 0.0.40
codegen_flags: <defaults>
</compile_context>

<pallas_src>
import functools

import jax
import jax.numpy as jnp
from jax import lax
from jax.experimental import pallas as pl
from jax.experimental.pallas import tpu as pltpu

NEG_SLOPE = 0.2
EPS = 1e-5


def _conv_inst_lrelu_kernel(patch_ref, w_ref, p_ref, o_ref, *, B, S, is_inst):
    """One group of B images per grid step.

    patch_ref : (K*K*Cin, B*S)  im2col patches (built in the wrapper), MXU dtype
    w_ref     : (Cout, K*K*Cin) folded conv weights, MXU dtype
    p_ref     : (Cout, 3)       packed per-channel params [bias, gamma, beta], f32
    o_ref     : (B, Cout, S)    output (lane-dense: S on the lane axis)
    """
    # Single wide MXU matmul across all B images in this step, f32 accumulation.
    acc = jnp.dot(w_ref[...], patch_ref[...],
                  preferred_element_type=jnp.float32)              # (Cout, B*S)

    bias = p_ref[:, 0:1]                                           # (Cout, 1)
    gamma = p_ref[:, 1:2]
    beta = p_ref[:, 2:3]
    inv_n = 1.0 / S

    # Per-image epilogue: static loop over B; each chunk is a lane-aligned
    # (Cout, S) static slice (S is a multiple of 128 whenever B > 1 is chosen),
    # so slicing / storing stays cheap.
    for b in range(B):
        chunk = acc[:, b * S:(b + 1) * S]                          # (Cout, S)
        if is_inst:
            # One-pass per-(image, channel) stats over the spatial (lane) axis.
            # NOTE: conv bias intentionally omitted -- a per-channel constant is
            # exactly cancelled by the mean subtraction.
            mean = jnp.sum(chunk, axis=1, keepdims=True) * inv_n   # (Cout, 1)
            ex2 = jnp.sum(chunk * chunk, axis=1, keepdims=True) * inv_n
            # Clamp: E[x^2] - mean^2 can round slightly negative for tiny
            # variances (worse with bf16 MXU operands); avoid NaN in rsqrt.
            var = jnp.maximum(ex2 - mean * mean, 0.0)
            scale = gamma * lax.rsqrt(var + EPS)                   # rsqrt -> EUP
            shift = beta - mean * scale
            y = chunk * scale + shift                              # 2 VPU ops/elem
        else:
            y = chunk + bias                                       # conv bias

        # LeakyReLU: max(y, a*y) is valid since NEG_SLOPE in (0, 1);
        # one vmul + vmax per vreg instead of vmul + vcmp + vselect.
        o_ref[b, :, :] = jnp.maximum(y, NEG_SLOPE * y).astype(o_ref.dtype)


def conv2d_inst_lrelu(x_nchw, w_oihw, bias, gamma, beta, *,
                      stride=1, padding=1, is_inst=True,
                      mxu_dtype=jnp.bfloat16, out_dtype=None,
                      images_per_step=None):
    """x_nchw: (N, Cin, H, W). Returns (N, Cout, Ho, Wo) in out_dtype (default x.dtype)."""
    assert stride == 1, "Pallas kernel only implements stride=1"
    N, Cin, H, W = x_nchw.shape
    Cout, _, K, _ = w_oihw.shape
    Ho = (H + 2 * padding - K) // stride + 1
    Wo = (W + 2 * padding - K) // stride + 1
    S = Ho * Wo
    KKC = K * K * Cin
    out_dtype = x_nchw.dtype if out_dtype is None else out_dtype

    # ---- wrapper-side layout glue (small XLA ops, outside the kernel) ----------
    # im2col hoisted out of the kernel: build the lane-dense (K*K*Cin, N*S) patch
    # operand once.  Contraction ordering is (kh, kw, cin), matching w_folded.
    x_pad = jnp.pad(x_nchw, ((0, 0), (0, 0), (padding, padding), (padding, padding)))
    taps = [x_pad[:, :, kh:kh + Ho, kw:kw + Wo]
            for kh in range(K) for kw in range(K)]                  # each (N, Cin, Ho, Wo)
    patch = jnp.concatenate(taps, axis=1)                           # (N, KKC, Ho, Wo)
    patch = jnp.transpose(patch.reshape(N, KKC, S), (1, 0, 2))      # (KKC, N, S)
    patch = patch.reshape(KKC, N * S).astype(mxu_dtype)             # pre-cast ONCE

    w_folded = (jnp.transpose(w_oihw, (0, 2, 3, 1))
                .reshape(Cout, KKC).astype(mxu_dtype))              # pre-cast ONCE
    params = jnp.stack([bias, gamma, beta], axis=1).astype(jnp.float32)  # (Cout, 3)

    # ---- grid / batching choice -------------------------------------------------
    if images_per_step is None:
        # Prefer exactly 2 grid steps: both v7x TensorCores get work under
        # dimension_semantics=("parallel",) and single-TC v5e/v6e only pays one
        # extra ~600-cycle step.  Fall back to one big step (B = N) if the lane
        # block would lose 128-alignment (or N is odd / 1).
        if N >= 2 and N % 2 == 0 and ((N // 2) * S) % 128 == 0:
            images_per_step = N // 2
        else:
            images_per_step = N
    B = images_per_step
    assert N % B == 0, (N, B)
    G = N // B
    if G > 1:
        assert (B * S) % 128 == 0, "lane block must stay 128-aligned when G > 1"

    kernel = functools.partial(_conv_inst_lrelu_kernel, B=B, S=S, is_inst=is_inst)

    out_flat = pl.pallas_call(
        kernel,
        out_shape=jax.ShapeDtypeStruct((N, Cout, S), out_dtype),
        grid_spec=pltpu.PrefetchScalarGridSpec(
            num_scalar_prefetch=0,
            grid=(G,),
            in_specs=[
                pl.BlockSpec((KKC, B * S), lambda g: (0, g)),       # patches
                pl.BlockSpec((Cout, KKC), lambda g: (0, 0)),        # folded weights
                pl.BlockSpec((Cout, 3), lambda g: (0, 0)),          # [bias, gamma, beta]
            ],
            out_specs=pl.BlockSpec((B, Cout, S), lambda g: (g, 0, 0)),
        ),
        compiler_params=pltpu.CompilerParams(
            dimension_semantics=("parallel",)),
    )(patch, w_folded, params)

    # Free reshape (no transpose) back to NCHW.
    return out_flat.reshape(N, Cout, Ho, Wo)


def _reference(x_nchw, w_oihw, bias, gamma, beta, *, padding=1, is_inst=True):
    """Pure-JAX reference mirroring the PyTorch module."""
    y = lax.conv_general_dilated(
        x_nchw, w_oihw, window_strides=(1, 1),
        padding=[(padding, padding), (padding, padding)],
        dimension_numbers=("NCHW", "OIHW", "NCHW"))
    y = y + bias.reshape(1, -1, 1, 1)
    if is_inst:
        mean = jnp.mean(y, axis=(2, 3), keepdims=True)
        var = jnp.mean((y - mean) ** 2, axis=(2, 3), keepdims=True)
        y = (y - mean) / jnp.sqrt(var + EPS)
        y = y * gamma.reshape(1, -1, 1, 1) + beta.reshape(1, -1, 1, 1)
    return jnp.where(y >= 0, y, NEG_SLOPE * y)


if __name__ == "__main__":
    # Module config: Conv2DInstLReLU(inc=4, outc=8, kernel_size=3, stride=1,
    #                                padding=1, negative_slope=0.2, is_inst=True)
    N, Cin, H, W = 2, 4, 16, 16
    Cout, K, PAD = 8, 3, 1

    key = jax.random.PRNGKey(0)
    kx, kw, kb, kg, kbe = jax.random.split(key, 5)

    x = jax.random.normal(kx, (N, Cin, H, W), jnp.float32)
    w = jax.random.normal(kw, (Cout, Cin, K, K), jnp.float32) * 0.1
    b = jax.random.normal(kb, (Cout,), jnp.float32) * 0.1
    gamma = 1.0 + 0.1 * jax.random.normal(kg, (Cout,), jnp.float32)
    beta = 0.1 * jax.random.normal(kbe, (Cout,), jnp.float32)

    # 1) Main config: bf16 MXU operands (f32 accumulation), default batching.
    out_bf16 = jax.block_until_ready(
        conv2d_inst_lrelu(x, w, b, gamma, beta, padding=PAD, is_inst=True,
                          mxu_dtype=jnp.bfloat16))

    # 2) Tight correctness checks with f32 operands (both is_inst branches).
    out_f32 = jax.block_until_ready(
        conv2d_inst_lrelu(x, w, b, gamma, beta, padding=PAD, is_inst=True,
                          mxu_dtype=jnp.float32))
    out_f32_noinst = jax.block_until_ready(
        conv2d_inst_lrelu(x, w, b, gamma, beta, padding=PAD, is_inst=False,
                          mxu_dtype=jnp.float32))

    # 3) Single-step batching path (B = N, grid=(1,): the v5e/v6e-preferred config).
    out_f32_b2 = jax.block_until_ready(
        conv2d_inst_lrelu(x, w, b, gamma, beta, padding=PAD, is_inst=True,
                          mxu_dtype=jnp.float32, images_per_step=N))

    ref_inst = _reference(x, w, b, gamma, beta, padding=PAD, is_inst=True)
    ref_noinst = _reference(x, w, b, gamma, beta, padding=PAD, is_inst=False)

    assert out_bf16.shape == (N, Cout, H, W), out_bf16.shape
    err_f32 = float(jnp.max(jnp.abs(out_f32 - ref_inst)))
    err_f32_ni = float(jnp.max(jnp.abs(out_f32_noinst - ref_noinst)))
    err_f32_b2 = float(jnp.max(jnp.abs(out_f32_b2 - ref_inst)))
    err_bf16 = float(jnp.max(jnp.abs(out_bf16 - ref_inst)))
    assert err_f32 < 5e-4, err_f32
    assert err_f32_ni < 5e-4, err_f32_ni
    assert err_f32_b2 < 5e-4, err_f32_b2
    assert err_bf16 < 5e-2, err_bf16   # bf16 operands, f32 accumulation

    print("KERNEL_OK")
</pallas_src>

<mosaic_0001>
module attributes {stable_mosaic.version = 11 : i64} {
  func.func @_conv_inst_lrelu_kernel(%arg0: i32, %arg1: memref<36x256xbf16, #tpu.memory_space<vmem>>, %arg2: memref<8x36xbf16, #tpu.memory_space<vmem>>, %arg3: memref<8x3xf32, #tpu.memory_space<vmem>>, %arg4: memref<1x8x256xf32, #tpu.memory_space<vmem>>) attributes {dimension_semantics = [#tpu.dimension_semantics<parallel>], iteration_bounds = array<i64: 2>, scalar_prefetch = 0 : i64, scratch_operands = 0 : i64, tpu.core_type = #tpu.core_type<tc>, window_params = [{transform_indices = @transform_0, window_bounds = array<i64: 36, 256>}, {pipeline_mode = #tpu.pipeline_mode<synchronous>, transform_indices = @transform_1, window_bounds = array<i64: 8, 36>}, {pipeline_mode = #tpu.pipeline_mode<synchronous>, transform_indices = @transform_2, window_bounds = array<i64: 8, 3>}, {transform_indices = @transform_3, window_bounds = array<i64: 1, 8, 256>}]} {
    %c0 = arith.constant 0 : index
    %c0_0 = arith.constant 0 : index
    %0 = vector.load %arg2[%c0, %c0_0] : memref<8x36xbf16, #tpu.memory_space<vmem>>, vector<8x36xbf16>
    %c0_1 = arith.constant 0 : index
    %c0_2 = arith.constant 0 : index
    %1 = vector.load %arg1[%c0_1, %c0_2] : memref<36x256xbf16, #tpu.memory_space<vmem>>, vector<36x256xbf16>
    %cst = arith.constant dense<0.000000e+00> : vector<8x256xf32>
    %2 = tpu.matmul %0, %1, %cst {dimension_numbers = #tpu.dot_dimension_numbers<[1], [0], [0], [1], [0, 0, 1, 1], [], []>} : vector<8x36xbf16>, vector<36x256xbf16>, vector<8x256xf32> -> vector<8x256xf32>
    %c0_3 = arith.constant 0 : index
    %c1 = arith.constant 1 : index
    %3 = vector.load %arg3[%c0_3, %c1] : memref<8x3xf32, #tpu.memory_space<vmem>>, vector<8x1xf32>
    %c0_4 = arith.constant 0 : index
    %c2 = arith.constant 2 : index
    %4 = vector.load %arg3[%c0_4, %c2] : memref<8x3xf32, #tpu.memory_space<vmem>>, vector<8x1xf32>
    %cst_5 = arith.constant dense<0.000000e+00> : vector<8xf32>
    %5 = vector.multi_reduction <add>, %2, %cst_5 [1] : vector<8x256xf32> to vector<8xf32>
    %6 = vector.shape_cast %5 : vector<8xf32> to vector<8x1xf32>
    %cst_6 = arith.constant 3.906250e-03 : f32
    %7 = vector.broadcast %cst_6 : f32 to vector<8x1xf32>
    %8 = arith.mulf %6, %7 : vector<8x1xf32>
    %9 = arith.mulf %2, %2 : vector<8x256xf32>
    %cst_7 = arith.constant dense<0.000000e+00> : vector<8xf32>
    %10 = vector.multi_reduction <add>, %9, %cst_7 [1] : vector<8x256xf32> to vector<8xf32>
    %11 = vector.shape_cast %10 : vector<8xf32> to vector<8x1xf32>
    %cst_8 = arith.constant 3.906250e-03 : f32
    %12 = vector.broadcast %cst_8 : f32 to vector<8x1xf32>
    %13 = arith.mulf %11, %12 : vector<8x1xf32>
    %14 = arith.mulf %8, %8 : vector<8x1xf32>
    %15 = arith.subf %13, %14 : vector<8x1xf32>
    %cst_9 = arith.constant 0.000000e+00 : f32
    %16 = vector.broadcast %cst_9 : f32 to vector<8x1xf32>
    %17 = arith.maximumf %15, %16 : vector<8x1xf32>
    %cst_10 = arith.constant 9.99999974E-6 : f32
    %18 = vector.broadcast %cst_10 : f32 to vector<8x1xf32>
    %19 = arith.addf %17, %18 : vector<8x1xf32>
    %20 = math.rsqrt %19 : vector<8x1xf32>
    %21 = arith.mulf %3, %20 : vector<8x1xf32>
    %22 = arith.mulf %8, %21 : vector<8x1xf32>
    %23 = arith.subf %4, %22 : vector<8x1xf32>
    %24 = vector.broadcast %21 : vector<8x1xf32> to vector<8x256xf32>
    %25 = arith.mulf %2, %24 : vector<8x256xf32>
    %26 = vector.broadcast %23 : vector<8x1xf32> to vector<8x256xf32>
    %27 = arith.addf %25, %26 : vector<8x256xf32>
    %cst_11 = arith.constant 2.000000e-01 : f32
    %28 = vector.broadcast %cst_11 : f32 to vector<8x256xf32>
    %29 = arith.mulf %28, %27 : vector<8x256xf32>
    %30 = arith.maximumf %27, %29 : vector<8x256xf32>
    %c0_12 = arith.constant 0 : index
    %c0_13 = arith.constant 0 : index
    %c0_14 = arith.constant 0 : index
    %31 = vector.load %arg4[%c0_12, %c0_13, %c0_14] : memref<1x8x256xf32, #tpu.memory_space<vmem>>, vector<1x8x256xf32>
    %32 = vector.shape_cast %31 : vector<1x8x256xf32> to vector<8x256xf32>
    %33 = vector.shape_cast %30 : vector<8x256xf32> to vector<1x8x256xf32>
    tpu.vector_store %arg4[%c0_12, %c0_13, %c0_14], %33 {strides = array<i32>} : memref<1x8x256xf32, #tpu.memory_space<vmem>>, vector<1x8x256xf32>,
    return
  }
  func.func @transform_0(%arg0: i32) -> (i32, i32) {
    %c0_i32 = arith.constant 0 : i32
    %c0_i32_0 = arith.constant 0 : i32
    return %c0_i32, %arg0 : i32, i32
  }
  func.func @transform_1(%arg0: i32) -> (i32, i32) {
    %c0_i32 = arith.constant 0 : i32
    %c0_i32_0 = arith.constant 0 : i32
    %c0_i32_1 = arith.constant 0 : i32
    return %c0_i32, %c0_i32_0 : i32, i32
  }
  func.func @transform_2(%arg0: i32) -> (i32, i32) {
    %c0_i32 = arith.constant 0 : i32
    %c0_i32_0 = arith.constant 0 : i32
    %c0_i32_1 = arith.constant 0 : i32
    return %c0_i32, %c0_i32_0 : i32, i32
  }
  func.func @transform_3(%arg0: i32) -> (i32, i32, i32) {
    %c0_i32 = arith.constant 0 : i32
    %c0_i32_0 = arith.constant 0 : i32
    %c0_i32_1 = arith.constant 0 : i32
    return %arg0, %c0_i32, %c0_i32_0 : i32, i32, i32
  }
}

</mosaic_0001>

<llo_original>
// kernel: tpu_custom_call.1
$region0: #{tpu_custom_call.1}
  #allocation0 [shape = 'u32[]', space=smem, size = 0x4, offset = 0x4, fixed_abs, tag = 'smem constant byte address 0x4 - core index']
  #allocation1 [shape = 'u32[144,128]{1,0:T(1,128)}', space=vmem, size = 0x12000, scoped, tag = 'internal scratch']
  %s0 = inlined_call_operand.hbm [shape: bf16[36,512], index: 0, kind: input, shape index: {}]
  %s1 = inlined_call_operand.vmem [shape: bf16[8,36], index: 1, kind: input, shape index: {}]
  %s2 = inlined_call_operand.vmem [shape: f32[8,3], index: 2, kind: input, shape index: {}]
  %s3 = inlined_call_operand.hbm [shape: f32[2,8,256], index: 3, kind: output, shape index: {}]
  %s4 = sld [smem:[#allocation0]]
  $region49: #{tpu_custom_call.1} parent=0
    _
  %s6 = ssub.s32 1, %s4
  %s7 = scalar_select 0, %s6, %s4
  $region1: #{tpu_custom_call.1} parent=0
    #allocation2 [shape = 'u8[40960]{0}', space=vmem, size = 0xa000, scoped, tag = 'input window, operand 0']
    #allocation3 [shape = 's32[2]{0}', space=sflag, size = 0x8, scoped, tag = 'scoped memory for tpu_custom_call.1']
    #allocation4 [shape = 's32[2]{0}', space=sflag, size = 0x8, scoped, tag = 'scoped memory for tpu_custom_call.1']
    #allocation5 [shape = 'u8[16384]{0}', space=vmem, size = 0x4000, scoped, tag = 'output window, operand 0']
    %8 = vsyncpa [#allocation3], 0
    %s9 = scalar_lea.sflag [#allocation3], 1
    %10 = vsyncpa %s9, 0
    %11 = vsyncpa [#allocation4], 0
    %s12 = scalar_lea.sflag [#allocation4], 1
    %13 = vsyncpa %s12, 0
    loop: start=0, step=1, limit=4
    $region2: #{tpu_custom_call.1} parent=1 // loop_pre_header
      _
    $region3: #{tpu_custom_call.1} parent=1 // loop_header
      %s15 = sphi 0, %s19
      %p16 = scmp.ge.s32.totalorder %s15, 4
      %s25 = sphi 0, %s27
      %s28 = sphi 0, %s25
      %s29 = sphi 0, %s28
      %s45 = sphi 0, %s29
      %s49 = sphi 0, %s49
      %s51 = sphi 0, %s49
      %s52 = sphi 0, %s51
      %s66 = sphi 0, %s52
      %s70 = sphi 0, %s70
      %s72 = sphi 0, %s70
      %s73 = sphi 0, %s72
      %s87 = sphi 0, %s73
      %s93 = sphi 0, %s95
      %s96 = sphi 0, %s93
      %s97 = sphi 0, %s96
      %s113 = sphi 0, %s97
    $region4: #{tpu_custom_call.1} parent=1 // loop_header_branch
      %18 = sbr.rel (%p16) target = $region8
    $region5: #{tpu_custom_call.1} parent=1 // loop_body
      %s20 = ssub.s32 %s15, 1
      %s21 = ssub.s32 %s15, 2
      %s22 = sadd.s32 %s15, 1
      %s23 = ssub.s32 %s15, %s22
      %p24 = scmp.eq.s32.totalorder %s23, 0
      %s26 = sadd.s32 %s25, 1
      %s27 = scalar_select %p24, %s25, %s26
      %p30 = pneg %p24
      %p31 = scmp.eq.s32.totalorder %s15, 1
      %p32 = por %p30, %p31
      %p33 = scmp.ne.s32.totalorder %s25, %s28
      %p34 = scmp.eq.s32.totalorder %s15, 0
      %p35 = por %p33, %p34
      %p36 = scmp.ne.s32.totalorder %s25, %s28
      %p37 = scmp.eq.s32.totalorder %s20, 1
      %p38 = por %p36, %p37
      %p39 = scmp.ne.s32.totalorder %s28, %s29
      %p40 = scmp.eq.s32.totalorder %s20, 0
      %p41 = por %p39, %p40
      %p42 = scmp.ne.s32.totalorder %s28, %s29
      %p43 = scmp.eq.s32.totalorder %s21, 1
      %p44 = por %p42, %p43
      %p46 = scmp.ne.s32.totalorder %s29, %s45
      %p47 = scmp.eq.s32.totalorder %s21, 0
      %p48 = por %p46, %p47
      %s50 = sadd.s32 %s49, 1
      %p53 = scmp.eq.s32.totalorder %s15, 1
      %p54 = scmp.ne.s32.totalorder %s49, %s51
      %p55 = scmp.eq.s32.totalorder %s15, 0
      %p56 = por %p54, %p55
      %p57 = scmp.ne.s32.totalorder %s49, %s51
      %p58 = scmp.eq.s32.totalorder %s20, 1
      %p59 = por %p57, %p58
      %p60 = scmp.ne.s32.totalorder %s51, %s52
      %p61 = scmp.eq.s32.totalorder %s20, 0
      %p62 = por %p60, %p61
      %p63 = scmp.ne.s32.totalorder %s51, %s52
      %p64 = scmp.eq.s32.totalorder %s21, 1
      %p65 = por %p63, %p64
      %p67 = scmp.ne.s32.totalorder %s52, %s66
      %p68 = scmp.eq.s32.totalorder %s21, 0
      %p69 = por %p67, %p68
      %s71 = sadd.s32 %s70, 1
      %p74 = scmp.eq.s32.totalorder %s15, 1
      %p75 = scmp.ne.s32.totalorder %s70, %s72
      %p76 = scmp.eq.s32.totalorder %s15, 0
      %p77 = por %p75, %p76
      %p78 = scmp.ne.s32.totalorder %s70, %s72
      %p79 = scmp.eq.s32.totalorder %s20, 1
      %p80 = por %p78, %p79
      %p81 = scmp.ne.s32.totalorder %s72, %s73
      %p82 = scmp.eq.s32.totalorder %s20, 0
      %p83 = por %p81, %p82
      %p84 = scmp.ne.s32.totalorder %s72, %s73
      %p85 = scmp.eq.s32.totalorder %s21, 1
      %p86 = por %p84, %p85
      %p88 = scmp.ne.s32.totalorder %s73, %s87
      %p89 = scmp.eq.s32.totalorder %s21, 0
      %p90 = por %p88, %p89
      %s91 = ssub.s32 %s15, %s22
      %p92 = scmp.eq.s32.totalorder %s91, 0
      %s94 = sadd.s32 %s93, 1
      %s95 = scalar_select %p92, %s93, %s94
      %p98 = pneg %p92
      %p99 = scmp.eq.s32.totalorder %s15, 1
      %p100 = por %p98, %p99
      %p101 = scmp.ne.s32.totalorder %s93, %s96
      %p102 = scmp.eq.s32.totalorder %s15, 0
      %p103 = por %p101, %p102
      %p104 = scmp.ne.s32.totalorder %s93, %s96
      %p105 = scmp.eq.s32.totalorder %s20, 1
      %p106 = por %p104, %p105
      %p107 = scmp.ne.s32.totalorder %s96, %s97
      %p108 = scmp.eq.s32.totalorder %s20, 0
      %p109 = por %p107, %p108
      %p110 = scmp.ne.s32.totalorder %s96, %s97
      %p111 = scmp.eq.s32.totalorder %s21, 1
      %p112 = por %p110, %p111
      %p114 = scmp.ne.s32.totalorder %s97, %s113
      %p115 = scmp.eq.s32.totalorder %s21, 0
      %p116 = por %p114, %p115
      %p117 = scmp.le.s32.totalorder 1, %s15
      %p118 = scmp.lt.s32.totalorder %s15, 3
      %p119 = pnand %p117, %p118
      %p120 = pneg %p119
      // Predicated region
      $region9: #{tpu_custom_call.1} parent=5 // pred_check
        _
      $region10: #{tpu_custom_call.1} parent=5 // pred_check_branch
        %122 = sbr.rel (%p119) target = $region12
      $region11: #{tpu_custom_call.1} parent=5 // pred_region
        %s123 = ssub.s32 %s15, 1
        // Predicated region
        $region13: #{tpu_custom_call.1} parent=11 // pred_check
          %p124 = pneg %p62
        $region14: #{tpu_custom_call.1} parent=11 // pred_check_branch
          %126 = sbr.rel (%p124) target = $region16
        $region15: #{tpu_custom_call.1} parent=11 // pred_region
          _
        $region16: #{tpu_custom_call.1} parent=11 // pred_fallthru
          _
        // Predicated region
        $region17: #{tpu_custom_call.1} parent=11 // pred_check
          %p127 = pneg %p83
        $region18: #{tpu_custom_call.1} parent=11 // pred_check_branch
          %129 = sbr.rel (%p127) target = $region20
        $region19: #{tpu_custom_call.1} parent=11 // pred_region
          _
        $region20: #{tpu_custom_call.1} parent=11 // pred_fallthru
          _
      $region12: #{tpu_custom_call.1} parent=5 // pred_fallthru
        _
      %p130 = scmp.lt.s32.totalorder %s15, 2
      // Predicated region
      $region21: #{tpu_custom_call.1} parent=5 // pred_check
        %p131 = pneg %p130
      $region22: #{tpu_custom_call.1} parent=5 // pred_check_branch
        %133 = sbr.rel (%p131) target = $region24
      $region23: #{tpu_custom_call.1} parent=5 // pred_region
        // Predicated region
        $region25: #{tpu_custom_call.1} parent=23 // pred_check
          %p134 = pneg %p35
        $region26: #{tpu_custom_call.1} parent=23 // pred_check_branch
          %136 = sbr.rel (%p134) target = $region28
        $region27: #{tpu_custom_call.1} parent=23 // pred_region
          %s137 = sand.u32 %s25, 1
          %s138 = scalar_lea.sflag [#allocation3], %s137
          %s139 = sand.u32 %s25, 1
          %s140 = smul.addr %s139, 40
          %s141 = scalar_lea.vmem [#allocation2], %s140
          %s142 = smul.u32 2, %s15
          %s144 = ssub.s32 640, 640
          %145 = vsyncadd %s138, %s144
          %s146 = smul.addr %s142, 64
          %s147 = scalar_lea.hbm %s0, %s146
          %s148 = sshll.u32 %s141, 4
          %s149 = int_to_ptr.vmem [resolvable:$true] %s148
          %154 = dma.hbm_to_vmem [thread:$0]  %s147, 640, %s149, %s138, 256, 128, 8
        $region28: #{tpu_custom_call.1} parent=23 // pred_fallthru
          _
      $region24: #{tpu_custom_call.1} parent=5 // pred_fallthru
        _
      %p155 = scmp.le.s32.totalorder 1, %s15
      %p156 = scmp.lt.s32.totalorder %s15, 3
      %p157 = pnand %p155, %p156
      %p158 = pneg %p157
      // Predicated region
      $region29: #{tpu_custom_call.1} parent=5 // pred_check
        _
      $region30: #{tpu_custom_call.1} parent=5 // pred_check_branch
        %160 = sbr.rel (%p157) target = $region32
      $region31: #{tpu_custom_call.1} parent=5 // pred_region
        %s161 = ssub.s32 %s15, 1
        %s162 = sand.u32 %s28, 1
        %s163 = scalar_lea.sflag [#allocation3], %s162
        %s164 = sand.u32 %s28, 1
        %s165 = smul.addr %s164, 40
        %s166 = scalar_lea.vmem [#allocation2], %s165
        // Predicated region
        $region33: #{tpu_custom_call.1} parent=31 // pred_check
          %p167 = pneg %p41
        $region34: #{tpu_custom_call.1} parent=31 // pred_check_branch
          %169 = sbr.rel (%p167) target = $region36
        $region35: #{tpu_custom_call.1} parent=31 // pred_region
          %170 = dma.done %s163, 640
        $region36: #{tpu_custom_call.1} parent=31 // pred_fallthru
          _
        %s171 = sand.u32 %s28, 1
        %s172 = scalar_lea.sflag [#allocation3], %s171
        %s173 = sand.u32 %s28, 1
        %s174 = smul.addr %s173, 40
        %s175 = scalar_lea.vmem [#allocation2], %s174
        %p176 = pneg %p41
        %p177 = pneg %p38
        %p178 = pneg %p62
        %p179 = pneg %p59
        %p180 = pneg %p83
        %p181 = pneg %p80
        %p182 = pneg %p109
        %p183 = pneg %p106
        %s184 = sand.u32 %s96, 1
        %s185 = scalar_lea.sflag [#allocation4], %s184
        %s186 = sand.u32 %s96, 1
        %s187 = smul.addr %s186, 16
        %s188 = scalar_lea.vmem [#allocation5], %s187
        %s189 = smul.u32 2, %s20
        %v191 = vld [vmem:[%s1] sm:$0xf]
        %v192 = vld [vmem:[%s166] sm:$0xff]
        %v193 = vld [vmem:[%s166 + $0x8] sm:$0xff]
        %v194 = vld [vmem:[%s166 + $0x10] sm:$0xff]
        %v195 = vld [vmem:[%s166 + $0x18] sm:$0xff]
        %v196 = vld [vmem:[%s166 + $0x20] sm:$0x33]
        %v202 = vunpack.c.l.b16 %v192
        %v203 = vunpack.c.h.b16 %v192
        %v204 = vunpack.c.l.b16 %v193
        %v205 = vunpack.c.h.b16 %v193
        %v206 = vunpack.c.l.b16 %v194
        %v207 = vunpack.c.h.b16 %v194
        %v208 = vunpack.c.l.b16 %v195
        %v209 = vunpack.c.h.b16 %v195
        %v210 = vunpack.c.l.b16 %v196
        %v211 = vunpack.c.h.b16 %v196
        %v212 = vpack.c.b16 %v204, %v202
        %v213 = vpack.c.b16 %v205, %v203
        %v214 = vpack.c.b16 %v208, %v206
        %v215 = vpack.c.b16 %v209, %v207
        %v216 = vpack.c.b16 %v210, %v210
        %v217 = vpack.c.b16 %v211, %v211
        %vm222 = vcmask 293888
        %v224 = vsel %vm222, %v191, 0
        %vm226 = vcmask 1041408
        %v228 = vsel %vm226, %v216, 0
        %v231 = vsel %vm226, %v217, 0
        %233 = vmatprep.subr.bf16.mxu0 %v213
        %234 = vmatpush1.bf16.msra.mxu0 %v212
        %235 = vmatprep.subr.bf16.mxu0 %v215
        %236 = vmatpush1.bf16.msra.mxu0 %v214
        %237 = vmatprep.subr.bf16.mxu0 %v231
        %238 = vmatpush1.bf16.msra.mxu0 %v228
        %239 = vmatprep.subr.bf16.mxu0 0
        %240 = vmatpush1.bf16.msra.mxu0 0
        %241 = vmatprep.subr.bf16.mxu0 0
        %242 = vmatpush1.bf16.msra.mxu0 0
        %243 = vmatprep.subr.bf16.mxu0 0
        %244 = vmatpush1.bf16.msra.mxu0 0
        %245 = vmatprep.subr.bf16.mxu0 0
        %246 = vmatpush1.bf16.msra.mxu0 0
        %247 = vmatprep.subr.bf16.mxu0 0
        %248 = vmatpush1.bf16.msra.mxu0 0
        %249 = vmatprep.subr.bf16.mxu0 0
        %250 = vmatpush1.bf16.msra.mxu0 0
        %251 = vmatprep.subr.bf16.mxu0 0
        %252 = vmatpush1.bf16.msra.mxu0 0
        %253 = vmatprep.subr.bf16.mxu0 0
        %254 = vmatpush1.bf16.msra.mxu0 0
        %255 = vmatprep.subr.bf16.mxu0 0
        %256 = vmatpush1.bf16.msra.mxu0 0
        %257 = vmatprep.subr.bf16.mxu0 0
        %258 = vmatpush1.bf16.msra.mxu0 0
        %259 = vmatprep.subr.bf16.mxu0 0
        %260 = vmatpush1.bf16.msra.mxu0 0
        %261 = vmatprep.subr.bf16.mxu0 0
        %262 = vmatpush1.bf16.msra.mxu0 0
        %263 = vmatprep.subr.bf16.mxu0 0
        %264 = vmatpush1.bf16.msra.mxu0 0
        %265 = vmatprep.mubr.bf16.mxu0 0
        %266 = vmatmul.mubr.bf16.gmra.mrb[0].mxu0 %v224
        %v267 = vpop.f32.mrb[0].mxu0
        %v268 = vadd.f32 0.0, %v267
        %v269 = vpop.f32.mrb[0].mxu0
        %v270 = vadd.f32 0.0, %v269
        %v271 = vpop.f32.mrb[0].mxu0
        %v272 = vpop.f32.mrb[0].mxu0
        %273 = vdwg.mxu0
        %v274 = vld [vmem:[%s2] sm:$0xff]
        %v275 = vadd.f32 %v268, %v270
        %276 = vadd.xlane.f32.xlu0 %v275
        %v277 = vpop.xlane.xlu0 %276
        %v278 = vmul.f32 %v277, 0.00390625
        %v279 = vmul.f32 %v268, %v268
        %v280 = vmul.f32 %v270, %v270
        %v281 = vadd.f32 %v279, %v280
        %282 = vadd.xlane.f32.xlu0 %v281
        %v283 = vpop.xlane.xlu0 %282
        %v284 = vmul.f32 %v283, 0.00390625
        %v285 = vmul.f32 %v278, %v278
        %v286 = vsub.f32 %v284, %v285
        %v287 = vmax.f32 %v286, 0.0
        %v288 = vadd.f32 %v287, 1e-05
        %v289 = vrsqrt.pop %v288
        %v290 = vmul.f32 %v274, %v289
        %v291 = vmul.f32 %v278, %v290
        %293 = vrot.lane.b32.xlu0 %v291, 1
        %v294 = vpop.permute.xlu0 %293
        %v296 = vsub.f32 %v274, %v294
        %298 = vset.pattern.permute.xlu0 1
        %299 = vperm.xlu0 %298, %v290
        %v300 = vpop.permute.xlu0 %299
        %v302 = vmul.f32 %v268, %v300
        %v303 = vmul.f32 %v270, %v300
        %305 = vset.pattern.permute.xlu0 2
        %306 = vperm.xlu0 %305, %v296
        %v307 = vpop.permute.xlu0 %306
        %v309 = vadd.f32 %v302, %v307
        %v310 = vadd.f32 %v303, %v307
        %v311 = vmul.f32 %v309, 0.2
        %v312 = vmul.f32 %v310, 0.2
        %v313 = vmax.f32 %v309, %v311
        %v314 = vmax.f32 %v310, %v312
        %315 = vst [vmem:[%s188] sm:$0xff] %v313
        %316 = vst [vmem:[%s188 + $0x8] sm:$0xff] %v314
        %s317 = sand.u32 %s96, 1
        %s318 = scalar_lea.sflag [#allocation4], %s317
        %s319 = sand.u32 %s96, 1
        %s320 = smul.addr %s319, 16
        %s321 = scalar_lea.vmem [#allocation5], %s320
        // Predicated region
        $region37: #{tpu_custom_call.1} parent=31 // pred_check
          %p322 = pneg %p106
        $region38: #{tpu_custom_call.1} parent=31 // pred_check_branch
          %324 = sbr.rel (%p322) target = $region40
        $region39: #{tpu_custom_call.1} parent=31 // pred_region
          %s326 = ssub.s32 256, 256
          %327 = vsyncadd %s318, %s326
          %s328 = smul.addr %s20, 2
          %s329 = smul.addr %s328, 128
          %s330 = scalar_lea.hbm %s3, %s329
          %s332 = sshll.u32 %s321, 4
          %s333 = int_to_ptr.vmem [resolvable:$true] %s332
          %335 = dma.vmem_to_hbm [thread:$0]  %s333, 256, %s330, %s318
        $region40: #{tpu_custom_call.1} parent=31 // pred_fallthru
          _
      $region32: #{tpu_custom_call.1} parent=5 // pred_fallthru
        _
      %p336 = scmp.le.s32.totalorder 2, %s15
      // Predicated region
      $region41: #{tpu_custom_call.1} parent=5 // pred_check
        %p337 = pneg %p336
      $region42: #{tpu_custom_call.1} parent=5 // pred_check_branch
        %339 = sbr.rel (%p337) target = $region44
      $region43: #{tpu_custom_call.1} parent=5 // pred_region
        %s340 = ssub.s32 %s15, 2
        // Predicated region
        $region45: #{tpu_custom_call.1} parent=43 // pred_check
          %p341 = pneg %p112
        $region46: #{tpu_custom_call.1} parent=43 // pred_check_branch
          %343 = sbr.rel (%p341) target = $region48
        $region47: #{tpu_custom_call.1} parent=43 // pred_region
          %s344 = sand.u32 %s97, 1
          %s345 = scalar_lea.sflag [#allocation4], %s344
          %s346 = sand.u32 %s97, 1
          %s347 = smul.addr %s346, 16
          %s348 = scalar_lea.vmem [#allocation5], %s347
          %349 = dma.done %s345, 256
        $region48: #{tpu_custom_call.1} parent=43 // pred_fallthru
          _
      $region44: #{tpu_custom_call.1} parent=5 // pred_fallthru
        _
    $region6: #{tpu_custom_call.1} parent=1 // loop_footer
      %s19 = sadd.s32 1, %s15
    $region7: #{tpu_custom_call.1} parent=1 // loop_footer_branch
      %14 = sbr.rel target = $region3
    $region8: #{tpu_custom_call.1} parent=1 // loop_exit
      _
    %350 = vsyncpa [#allocation3], 1
    %s351 = scalar_lea.sflag [#allocation3], 1
    %352 = vsyncpa %s351, 1
    %353 = vsyncpa [#allocation4], 1
    %s354 = scalar_lea.sflag [#allocation4], 1
    %355 = vsyncpa %s354, 1

</llo_original>
